<compile_context>
chip_gen: v6e
topology: v6e:2x2x1
jax: 0.10.0
libtpu: 0.0.40
codegen_flags: <defaults>
</compile_context>

<pallas_src>
import jax
import jax.numpy as jnp
from jax.experimental import pallas as pl
from jax.experimental.pallas import tpu as pltpu


def _round_up(x, m):
    return ((x + m - 1) // m) * m


def _vmem_capacity():
    """Physical per-core VMEM bytes; conservative 64 MiB (v7x) fallback."""
    try:
        return int(pltpu.get_tpu_info().vmem_capacity_bytes)
    except Exception:
        return 64 * 1024 * 1024


# Per-grid-step overhead expressed in "streamed A elements" (~0.35 us of HBM
# bandwidth).  Used only by the tile-selection heuristic.
_STEP_OVERHEAD_ELEMS = 150_000


def _choose_tiles(M, K, n_p, *, budget, itemsize):
    """Pick row/contraction tiles (tm, tk) under a VMEM byte budget.

    Cost model (element units): padded-A traffic + B re-fetch traffic (B is
    re-fetched per row tile when K is tiled) + fixed per-grid-step overhead.
    Minimizing this limits row-padding waste without collapsing to tiny tiles.
    """
    m8 = _round_up(max(M, 1), 8)
    tm_cands = [t for t in (1024, 512, 256, 128, 64, 32, 16, 8) if t <= m8]
    tk_cands = [K] + [t for t in (2048, 1024, 512, 256, 128) if t < K]

    def config(tm, tk):
        full_k = (tk == K)
        k_pad = K if full_k else _round_up(K, tk)
        n_k = 1 if full_k else k_pad // tk
        n_rows = _round_up(M, tm)
        n_row_tiles = n_rows // tm
        b_bufs = 1 if n_k == 1 else 2
        vmem = (2 * tm * tk * itemsize           # A row tile, double-buffered
                + b_bufs * tk * n_p * itemsize   # B (single-buffered if constant)
                + n_p * 4                        # bias (f32)
                + 2 * tm * n_p * 4               # output, double-buffered (f32)
                + tm * n_p * 4)                  # f32 accumulator scratch
        steps = n_row_tiles * n_k
        b_traffic = (n_row_tiles if n_k > 1 else 1) * k_pad * n_p
        cost = n_rows * k_pad + b_traffic + steps * _STEP_OVERHEAD_ELEMS
        return dict(tm=tm, tk=tk, n_rows=n_rows, k_pad=k_pad, n_k=n_k,
                    vmem=vmem, cost=cost)

    best, best_key = None, None
    for tk in tk_cands:
        for tm in tm_cands:
            c = config(tm, tk)
            if c["vmem"] > budget:
                continue
            key = (c["cost"], -c["tm"], c["n_k"])
            if best is None or key < best_key:
                best, best_key = c, key
    if best is None:
        # Budget too small even for minimal tiles; take them and rely on
        # vmem_limit_bytes being raised accordingly.
        best = config(8, K if K <= 128 else 128)

    # Megacore (v7x has 2 TensorCores): make sure the "parallel" row axis has
    # at least two tiles whenever the problem allows it.
    if best["n_rows"] // best["tm"] < 2 and best["tm"] > 8:
        best = config(max(8, best["tm"] // 2), best["tk"])
    return best


def _matmul_bias_kernel(a_ref, b_ref, bias_ref, o_ref, acc_ref):
    """One (row-tile, k-tile) grid step of  out = A @ B + bias."""
    k = pl.program_id(1)

    @pl.when(k == 0)
    def _init():
        acc_ref[...] = jnp.zeros_like(acc_ref)

    acc_ref[...] += jnp.dot(a_ref[...], b_ref[...],
                            preferred_element_type=jnp.float32)

    @pl.when(k == pl.num_programs(1) - 1)
    def _finalize():
        o_ref[...] = (acc_ref[...] + bias_ref[...]).astype(o_ref.dtype)


def _pallas_matmul_bias(a, b, bias=None, *, compute_dtype=jnp.bfloat16,
                        out_dtype=jnp.float32):
    """out = a @ b (+ bias) as a row- and K-tiled Pallas matmul (f32 accum)."""
    M, K = a.shape
    K2, Nc = b.shape
    assert K == K2, (a.shape, b.shape)

    n_p = _round_up(Nc, 128)                      # lane-dense output columns
    itemsize = jnp.dtype(compute_dtype).itemsize
    capacity = _vmem_capacity()
    cfg = _choose_tiles(M, K, n_p, budget=int(capacity * 0.45),
                        itemsize=itemsize)
    tm, tk = cfg["tm"], cfg["tk"]
    n_rows, k_pad, n_k = cfg["n_rows"], cfg["k_pad"], cfg["n_k"]
    n_row_tiles = n_rows // tm
    grid = (n_row_tiles, n_k)

    # One-time layout prep outside the hot loop: zero-pad + cast.
    a_p = a
    if (n_rows, k_pad) != (M, K):
        a_p = jnp.pad(a, ((0, n_rows - M), (0, k_pad - K)))
    a_p = a_p.astype(compute_dtype)
    b_p = b
    if (k_pad, n_p) != (K, Nc):
        b_p = jnp.pad(b, ((0, k_pad - K), (0, n_p - Nc)))
    b_p = b_p.astype(compute_dtype)
    if bias is None:
        bias_p = jnp.zeros((1, n_p), jnp.float32)
    else:
        bias_p = jnp.pad(bias.reshape(1, Nc).astype(jnp.float32),
                         ((0, 0), (0, n_p - Nc)))

    # Explicit VMEM limit derived from the real buffer sizes (lifts v5e's
    # ~16 MiB scoped default; stays under v7x's 64 MiB physical).
    vmem_cap = max(32 << 20, int(capacity * 0.9))
    vmem_limit = min(max(int(cfg["vmem"] * 1.3) + (2 << 20), 32 << 20), vmem_cap)

    # Accurate cost estimate: constant-index blocks are fetched once, not once
    # per grid step.
    flops = 2 * n_rows * k_pad * n_p
    b_fetches = 1 if n_k == 1 else n_row_tiles
    bytes_accessed = (n_rows * k_pad * itemsize
                      + b_fetches * k_pad * n_p * itemsize
                      + n_p * 4
                      + n_rows * n_p * jnp.dtype(out_dtype).itemsize)
    cost = pl.CostEstimate(flops=flops, transcendentals=0,
                           bytes_accessed=bytes_accessed)

    def call(use_buffered):
        def maybe_single(shape, index_map, constant):
            # Constant-index blocks only need one VMEM buffer.
            if constant and use_buffered:
                return pl.BlockSpec(shape, index_map,
                                    pipeline_mode=pl.Buffered(1))
            return pl.BlockSpec(shape, index_map)

        return pl.pallas_call(
            _matmul_bias_kernel,
            out_shape=jax.ShapeDtypeStruct((n_rows, n_p), out_dtype),
            grid_spec=pltpu.PrefetchScalarGridSpec(
                num_scalar_prefetch=0,
                grid=grid,
                in_specs=[
                    pl.BlockSpec((tm, tk), lambda i, k: (i, k)),      # A tile
                    maybe_single((tk, n_p), lambda i, k: (k, 0),      # B tile
                                 constant=(n_k == 1)),
                    maybe_single((1, n_p), lambda i, k: (0, 0),       # bias
                                 constant=True),
                ],
                out_specs=pl.BlockSpec((tm, n_p), lambda i, k: (i, 0)),
                scratch_shapes=[pltpu.VMEM((tm, n_p), jnp.float32)],
            ),
            compiler_params=pltpu.CompilerParams(
                dimension_semantics=("parallel", "arbitrary"),
                vmem_limit_bytes=vmem_limit,
            ),
            cost_estimate=cost,
        )(a_p, b_p, bias_p)

    try:
        out_padded = call(use_buffered=True)
    except Exception:
        # pl.Buffered(1) single-buffering is a perf-only hint; fall back to
        # default double-buffering if this JAX build rejects it.
        out_padded = call(use_buffered=False)

    # Strip row / lane padding.
    return out_padded[:M, :Nc]


def gcn_forward(A, X, W, b, *, compute_dtype=jnp.bfloat16):
    """GCN forward: Dropout(p=0) -> A @ X -> Linear(in_dim, out_dim).

    A: (N, N), X: (N, in_dim), W: (out_dim, in_dim), b: (out_dim,).
    Returns (N, out_dim) in float32.
    """
    N, in_dim = X.shape
    out_dim = W.shape[0]
    W_T = W.T  # (in_dim, out_dim); nn.Linear computes x @ W.T + b

    # Dropout(p=0) is the identity -> omitted.
    if out_dim <= in_dim:
        # Contracting layer: project first so the dominant O(N^2) aggregation
        # streams the narrower (N, out_dim) operand.  The small projection is
        # kept in f32 to avoid an extra rounding step before the aggregation.
        XW = _pallas_matmul_bias(X, W_T, None, compute_dtype=jnp.float32)
        out = _pallas_matmul_bias(A, XW, b, compute_dtype=compute_dtype)
    else:
        # Expanding layer: aggregate in the narrower in_dim space first.
        AX = _pallas_matmul_bias(A, X, None, compute_dtype=compute_dtype)
        out = _pallas_matmul_bias(AX, W_T, b, compute_dtype=jnp.float32)
    return out


if __name__ == "__main__":
    # Small, deterministic setup consistent with the module.
    N = 8          # number of graph nodes
    in_dim = 32
    out_dim = 16

    key = jax.random.PRNGKey(0)
    k_a, k_x, k_w, k_b = jax.random.split(key, 4)

    A = jax.random.normal(k_a, (N, N), dtype=jnp.float32)
    X = jax.random.normal(k_x, (N, in_dim), dtype=jnp.float32)
    W = jax.random.normal(k_w, (out_dim, in_dim), dtype=jnp.float32) * 0.1
    b = jax.random.normal(k_b, (out_dim,), dtype=jnp.float32) * 0.1

    out = gcn_forward(A, X, W, b)
    out = jax.block_until_ready(out)

    # Reference in plain f32 JAX (same math as the PyTorch module).  The
    # aggregation runs bf16-in / f32-accumulate, so tolerance is set loosely.
    ref = (A @ X) @ W.T + b
    assert out.shape == (N, out_dim)
    max_err = float(jnp.max(jnp.abs(out - ref)))
    assert jnp.allclose(out, ref, atol=1e-1, rtol=5e-2), max_err

    print("KERNEL_OK")
</pallas_src>

<mosaic_0001>
module attributes {stable_mosaic.version = 11 : i64} {
  func.func @_matmul_bias_kernel(%arg0: i32, %arg1: i32, %arg2: memref<8x32xf32, #tpu.memory_space<vmem>>, %arg3: memref<32x128xf32, #tpu.memory_space<vmem>>, %arg4: memref<1x128xf32, #tpu.memory_space<vmem>>, %arg5: memref<8x128xf32, #tpu.memory_space<vmem>>, %arg6: memref<8x128xf32, #tpu.memory_space<vmem>>) attributes {dimension_semantics = [#tpu.dimension_semantics<parallel>, #tpu.dimension_semantics<arbitrary>], iteration_bounds = array<i64: 1, 1>, scalar_prefetch = 0 : i64, scratch_operands = 1 : i64, tpu.core_type = #tpu.core_type<tc>, window_params = [{transform_indices = @transform_0, window_bounds = array<i64: 8, 32>}, {pipeline_mode = #tpu.pipeline_mode<synchronous>, transform_indices = @transform_1, window_bounds = array<i64: 32, 128>}, {pipeline_mode = #tpu.pipeline_mode<synchronous>, transform_indices = @transform_2, window_bounds = array<i64: 1, 128>}, {transform_indices = @transform_3, window_bounds = array<i64: 8, 128>}]} {
    %c0_i32 = arith.constant 0 : i32
    %0 = arith.cmpi eq, %arg1, %c0_i32 : i32
    %1 = arith.extui %0 : i1 to i32
    %c0_i32_0 = arith.constant 0 : i32
    %2 = arith.cmpi ne, %1, %c0_i32_0 : i32
    scf.if %2 {
      %cst_10 = arith.constant 0.000000e+00 : f32
      %12 = vector.broadcast %cst_10 : f32 to vector<8x128xf32>
      %c0_11 = arith.constant 0 : index
      %c0_12 = arith.constant 0 : index
      %13 = vector.load %arg6[%c0_11, %c0_12] : memref<8x128xf32, #tpu.memory_space<vmem>>, vector<8x128xf32>
      tpu.vector_store %arg6[%c0_11, %c0_12], %12 {strides = array<i32>} : memref<8x128xf32, #tpu.memory_space<vmem>>, vector<8x128xf32>,
    } else {
    }
    %c0 = arith.constant 0 : index
    %c0_1 = arith.constant 0 : index
    %3 = vector.load %arg6[%c0, %c0_1] : memref<8x128xf32, #tpu.memory_space<vmem>>, vector<8x128xf32>
    %c0_2 = arith.constant 0 : index
    %c0_3 = arith.constant 0 : index
    %4 = vector.load %arg2[%c0_2, %c0_3] : memref<8x32xf32, #tpu.memory_space<vmem>>, vector<8x32xf32>
    %c0_4 = arith.constant 0 : index
    %c0_5 = arith.constant 0 : index
    %5 = vector.load %arg3[%c0_4, %c0_5] : memref<32x128xf32, #tpu.memory_space<vmem>>, vector<32x128xf32>
    %cst = arith.constant dense<0.000000e+00> : vector<8x128xf32>
    %6 = tpu.matmul %4, %5, %cst {dimension_numbers = #tpu.dot_dimension_numbers<[1], [0], [0], [1], [0, 0, 1, 1], [], []>} : vector<8x32xf32>, vector<32x128xf32>, vector<8x128xf32> -> vector<8x128xf32>
    %7 = arith.addf %3, %6 : vector<8x128xf32>
    %c0_6 = arith.constant 0 : index
    %c0_7 = arith.constant 0 : index
    %8 = vector.load %arg6[%c0_6, %c0_7] : memref<8x128xf32, #tpu.memory_space<vmem>>, vector<8x128xf32>
    tpu.vector_store %arg6[%c0_6, %c0_7], %7 {strides = array<i32>} : memref<8x128xf32, #tpu.memory_space<vmem>>, vector<8x128xf32>,
    %c0_i32_8 = arith.constant 0 : i32
    %9 = arith.cmpi eq, %arg1, %c0_i32_8 : i32
    %10 = arith.extui %9 : i1 to i32
    %c0_i32_9 = arith.constant 0 : i32
    %11 = arith.cmpi ne, %10, %c0_i32_9 : i32
    scf.if %11 {
      %c0_10 = arith.constant 0 : index
      %c0_11 = arith.constant 0 : index
      %12 = vector.load %arg6[%c0_10, %c0_11] : memref<8x128xf32, #tpu.memory_space<vmem>>, vector<8x128xf32>
      %c0_12 = arith.constant 0 : index
      %c0_13 = arith.constant 0 : index
      %13 = vector.load %arg4[%c0_12, %c0_13] : memref<1x128xf32, #tpu.memory_space<vmem>>, vector<1x128xf32>
      %14 = vector.broadcast %13 : vector<1x128xf32> to vector<8x128xf32>
      %15 = arith.addf %12, %14 : vector<8x128xf32>
      %c0_14 = arith.constant 0 : index
      %c0_15 = arith.constant 0 : index
      %16 = vector.load %arg5[%c0_14, %c0_15] : memref<8x128xf32, #tpu.memory_space<vmem>>, vector<8x128xf32>
      tpu.vector_store %arg5[%c0_14, %c0_15], %15 {strides = array<i32>} : memref<8x128xf32, #tpu.memory_space<vmem>>, vector<8x128xf32>,
    } else {
    }
    return
  }
  func.func @transform_0(%arg0: i32, %arg1: i32) -> (i32, i32) {
    %c0_i32 = arith.constant 0 : i32
    return %arg0, %arg1 : i32, i32
  }
  func.func @transform_1(%arg0: i32, %arg1: i32) -> (i32, i32) {
    %c0_i32 = arith.constant 0 : i32
    %c0_i32_0 = arith.constant 0 : i32
    return %arg1, %c0_i32 : i32, i32
  }
  func.func @transform_2(%arg0: i32, %arg1: i32) -> (i32, i32) {
    %c0_i32 = arith.constant 0 : i32
    %c0_i32_0 = arith.constant 0 : i32
    %c0_i32_1 = arith.constant 0 : i32
    return %c0_i32, %c0_i32_0 : i32, i32
  }
  func.func @transform_3(%arg0: i32, %arg1: i32) -> (i32, i32) {
    %c0_i32 = arith.constant 0 : i32
    %c0_i32_0 = arith.constant 0 : i32
    return %arg0, %c0_i32 : i32, i32
  }
}

module attributes {stable_mosaic.version = 11 : i64} {
  func.func @_matmul_bias_kernel(%arg0: i32, %arg1: i32, %arg2: memref<8x32xf32, #tpu.memory_space<vmem>>, %arg3: memref<32x128xf32, #tpu.memory_space<vmem>>, %arg4: memref<1x128xf32, #tpu.memory_space<vmem>>, %arg5: memref<8x128xf32, #tpu.memory_space<vmem>>, %arg6: memref<8x128xf32, #tpu.memory_space<vmem>>) attributes {dimension_semantics = [#tpu.dimension_semantics<parallel>, #tpu.dimension_semantics<arbitrary>], iteration_bounds = array<i64: 1, 1>, scalar_prefetch = 0 : i64, scratch_operands = 1 : i64, tpu.core_type = #tpu.core_type<tc>, window_params = [{transform_indices = @transform_0, window_bounds = array<i64: 8, 32>}, {transform_indices = @transform_1, window_bounds = array<i64: 32, 128>}, {pipeline_mode = #tpu.pipeline_mode<synchronous>, transform_indices = @transform_2, window_bounds = array<i64: 1, 128>}, {transform_indices = @transform_3, window_bounds = array<i64: 8, 128>}]} {
    %c0_i32 = arith.constant 0 : i32
    %0 = arith.cmpi eq, %arg1, %c0_i32 : i32
    %1 = arith.extui %0 : i1 to i32
    %c0_i32_0 = arith.constant 0 : i32
    %2 = arith.cmpi ne, %1, %c0_i32_0 : i32
    scf.if %2 {
      %cst_10 = arith.constant 0.000000e+00 : f32
      %12 = vector.broadcast %cst_10 : f32 to vector<8x128xf32>
      %c0_11 = arith.constant 0 : index
      %c0_12 = arith.constant 0 : index
      %13 = vector.load %arg6[%c0_11, %c0_12] : memref<8x128xf32, #tpu.memory_space<vmem>>, vector<8x128xf32>
      tpu.vector_store %arg6[%c0_11, %c0_12], %12 {strides = array<i32>} : memref<8x128xf32, #tpu.memory_space<vmem>>, vector<8x128xf32>,
    } else {
    }
    %c0 = arith.constant 0 : index
    %c0_1 = arith.constant 0 : index
    %3 = vector.load %arg6[%c0, %c0_1] : memref<8x128xf32, #tpu.memory_space<vmem>>, vector<8x128xf32>
    %c0_2 = arith.constant 0 : index
    %c0_3 = arith.constant 0 : index
    %4 = vector.load %arg2[%c0_2, %c0_3] : memref<8x32xf32, #tpu.memory_space<vmem>>, vector<8x32xf32>
    %c0_4 = arith.constant 0 : index
    %c0_5 = arith.constant 0 : index
    %5 = vector.load %arg3[%c0_4, %c0_5] : memref<32x128xf32, #tpu.memory_space<vmem>>, vector<32x128xf32>
    %cst = arith.constant dense<0.000000e+00> : vector<8x128xf32>
    %6 = tpu.matmul %4, %5, %cst {dimension_numbers = #tpu.dot_dimension_numbers<[1], [0], [0], [1], [0, 0, 1, 1], [], []>} : vector<8x32xf32>, vector<32x128xf32>, vector<8x128xf32> -> vector<8x128xf32>
    %7 = arith.addf %3, %6 : vector<8x128xf32>
    %c0_6 = arith.constant 0 : index
    %c0_7 = arith.constant 0 : index
    %8 = vector.load %arg6[%c0_6, %c0_7] : memref<8x128xf32, #tpu.memory_space<vmem>>, vector<8x128xf32>
    tpu.vector_store %arg6[%c0_6, %c0_7], %7 {strides = array<i32>} : memref<8x128xf32, #tpu.memory_space<vmem>>, vector<8x128xf32>,
    %c0_i32_8 = arith.constant 0 : i32
    %9 = arith.cmpi eq, %arg1, %c0_i32_8 : i32
    %10 = arith.extui %9 : i1 to i32
    %c0_i32_9 = arith.constant 0 : i32
    %11 = arith.cmpi ne, %10, %c0_i32_9 : i32
    scf.if %11 {
      %c0_10 = arith.constant 0 : index
      %c0_11 = arith.constant 0 : index
      %12 = vector.load %arg6[%c0_10, %c0_11] : memref<8x128xf32, #tpu.memory_space<vmem>>, vector<8x128xf32>
      %c0_12 = arith.constant 0 : index
      %c0_13 = arith.constant 0 : index
      %13 = vector.load %arg4[%c0_12, %c0_13] : memref<1x128xf32, #tpu.memory_space<vmem>>, vector<1x128xf32>
      %14 = vector.broadcast %13 : vector<1x128xf32> to vector<8x128xf32>
      %15 = arith.addf %12, %14 : vector<8x128xf32>
      %c0_14 = arith.constant 0 : index
      %c0_15 = arith.constant 0 : index
      %16 = vector.load %arg5[%c0_14, %c0_15] : memref<8x128xf32, #tpu.memory_space<vmem>>, vector<8x128xf32>
      tpu.vector_store %arg5[%c0_14, %c0_15], %15 {strides = array<i32>} : memref<8x128xf32, #tpu.memory_space<vmem>>, vector<8x128xf32>,
    } else {
    }
    return
  }
  func.func @transform_0(%arg0: i32, %arg1: i32) -> (i32, i32) {
    %c0_i32 = arith.constant 0 : i32
    return %arg0, %arg1 : i32, i32
  }
  func.func @transform_1(%arg0: i32, %arg1: i32) -> (i32, i32) {
    %c0_i32 = arith.constant 0 : i32
    %c0_i32_0 = arith.constant 0 : i32
    return %arg1, %c0_i32 : i32, i32
  }
  func.func @transform_2(%arg0: i32, %arg1: i32) -> (i32, i32) {
    %c0_i32 = arith.constant 0 : i32
    %c0_i32_0 = arith.constant 0 : i32
    %c0_i32_1 = arith.constant 0 : i32
    return %c0_i32, %c0_i32_0 : i32, i32
  }
  func.func @transform_3(%arg0: i32, %arg1: i32) -> (i32, i32) {
    %c0_i32 = arith.constant 0 : i32
    %c0_i32_0 = arith.constant 0 : i32
    return %arg0, %c0_i32 : i32, i32
  }
}

</mosaic_0001>

<llo_original>
// kernel: tpu_custom_call.1
$region0: #{tpu_custom_call.1}
  #allocation0 [shape = 'u32[]', space=smem, size = 0x4, offset = 0x4, fixed_abs, tag = 'smem constant byte address 0x4 - core index']
  #allocation1 [shape = 'u32[144,128]{1,0:T(1,128)}', space=vmem, size = 0x12000, scoped, tag = 'internal scratch']
  #allocation2 [shape = 'f32[8,128]{1,0:T(8,128)}', space=vmem, size = 0x1000, scoped, tag = 'scratch operand']
  %s0 = inlined_call_operand.hbm [shape: f32[8,32], index: 0, kind: input, shape index: {}]
  %s1 = inlined_call_operand.hbm [shape: f32[32,128], index: 1, kind: input, shape index: {}]
  %s2 = inlined_call_operand.vmem [shape: f32[1,128], index: 2, kind: input, shape index: {}]
  %s3 = inlined_call_operand.hbm [shape: f32[8,128], index: 3, kind: output, shape index: {}]
  %s4 = sld [smem:[#allocation0]]
  $region38: #{tpu_custom_call.1} parent=0
    _
  %s6 = ssub.s32 1, %s4
  %s7 = scalar_select 0, %s6, %s4
  $region1: #{tpu_custom_call.1} parent=0
    #allocation3 [shape = 'u8[4096]{0}', space=vmem, size = 0x1000, scoped, tag = 'input window, operand 0, single buffered']
    #allocation4 [shape = 's32[1]{0}', space=sflag, size = 0x4, scoped, tag = 'scoped memory for tpu_custom_call.1']
    #allocation5 [shape = 's32[1]{0}', space=sflag, size = 0x4, scoped, tag = 'scoped memory for tpu_custom_call.1']
    #allocation6 [shape = 'u8[16384]{0}', space=vmem, size = 0x4000, scoped, tag = 'input window, operand 1, single buffered']
    #allocation7 [shape = 's32[1]{0}', space=sflag, size = 0x4, scoped, tag = 'scoped memory for tpu_custom_call.1']
    #allocation8 [shape = 'u8[4096]{0}', space=vmem, size = 0x1000, scoped, tag = 'output window, operand 0, single buffered']
    %8 = vsyncpa [#allocation4], 0
    %9 = vsyncpa [#allocation7], 0
    %10 = vsyncpa [#allocation5], 0
    // Predicated region
    $region2: #{tpu_custom_call.1} parent=1 // pred_check
      _
    $region3: #{tpu_custom_call.1} parent=1 // pred_check_branch
      %12 = sbr.rel (0) target = $region5
    $region4: #{tpu_custom_call.1} parent=1 // pred_region
      %s14 = ssub.s32 128, 128
      %15 = vsyncadd [#allocation4], %s14
      %s17 = sshll.u32 [#allocation3], 4
      %s18 = int_to_ptr.vmem [resolvable:$true] %s17
      %20 = dma.hbm_to_vmem [thread:$0]  %s0, 128, %s18, [#allocation4]
    $region5: #{tpu_custom_call.1} parent=1 // pred_fallthru
      _
    // Predicated region
    $region6: #{tpu_custom_call.1} parent=1 // pred_check
      _
    $region7: #{tpu_custom_call.1} parent=1 // pred_check_branch
      %22 = sbr.rel (0) target = $region9
    $region8: #{tpu_custom_call.1} parent=1 // pred_region
      %s24 = ssub.s32 512, 512
      %25 = vsyncadd [#allocation7], %s24
      %s26 = sshll.u32 [#allocation6], 4
      %s27 = int_to_ptr.vmem [resolvable:$true] %s26
      %32 = dma.hbm_to_vmem [thread:$0]  %s1, 512, %s27, [#allocation7], 128, 128, 8
    $region9: #{tpu_custom_call.1} parent=1 // pred_fallthru
      _
    // Predicated region
    $region10: #{tpu_custom_call.1} parent=1 // pred_check
      _
    $region11: #{tpu_custom_call.1} parent=1 // pred_check_branch
      %34 = sbr.rel (0) target = $region13
    $region12: #{tpu_custom_call.1} parent=1 // pred_region
      _
    $region13: #{tpu_custom_call.1} parent=1 // pred_fallthru
      _
    // Predicated region
    $region14: #{tpu_custom_call.1} parent=1 // pred_check
      _
    $region15: #{tpu_custom_call.1} parent=1 // pred_check_branch
      %36 = sbr.rel (0) target = $region17
    $region16: #{tpu_custom_call.1} parent=1 // pred_region
      %37 = dma.done [#allocation4], 128
    $region17: #{tpu_custom_call.1} parent=1 // pred_fallthru
      _
    // Predicated region
    $region18: #{tpu_custom_call.1} parent=1 // pred_check
      _
    $region19: #{tpu_custom_call.1} parent=1 // pred_check_branch
      %39 = sbr.rel (0) target = $region21
    $region20: #{tpu_custom_call.1} parent=1 // pred_region
      %40 = dma.done [#allocation7], 512
    $region21: #{tpu_custom_call.1} parent=1 // pred_fallthru
      _
    %p41 = scmp.eq.s32.totalorder 0, 0
    // Predicated region
    $region22: #{tpu_custom_call.1} parent=1 // pred_check
      %p42 = pneg %p41
    $region23: #{tpu_custom_call.1} parent=1 // pred_check_branch
      %44 = sbr.rel (%p42) target = $region25
    $region24: #{tpu_custom_call.1} parent=1 // pred_region
      %45 = vst [vmem:[#allocation2] sm:$0xff] 0.0
    $region25: #{tpu_custom_call.1} parent=1 // pred_fallthru
      _
    %v46 = vld [vmem:[#allocation2] sm:$0xff]
    %v47 = vld [vmem:[#allocation3] sm:$0xff]
    %v48 = vld [vmem:[#allocation6] sm:$0xff]
    %v49 = vld [vmem:[#allocation6 + $0x8] sm:$0xff]
    %v50 = vld [vmem:[#allocation6 + $0x10] sm:$0xff]
    %v51 = vld [vmem:[#allocation6 + $0x18] sm:$0xff]
    %vm52 = vcmask 261120
    %v54 = vsel %vm52, %v47, 0
    %56 = vmatprep.subr.mxu0 0.0
    %57 = vmatpush1.msra.mxu0 0.0
    %58 = vmatprep.subr.mxu0 0.0
    %59 = vmatpush1.msra.mxu0 0.0
    %60 = vmatprep.subr.mxu0 0.0
    %61 = vmatpush1.msra.mxu0 0.0
    %62 = vmatprep.subr.mxu0 0.0
    %63 = vmatpush1.msra.mxu0 0.0
    %64 = vmatprep.subr.mxu0 0.0
    %65 = vmatpush1.msra.mxu0 0.0
    %66 = vmatprep.subr.mxu0 0.0
    %67 = vmatpush1.msra.mxu0 0.0
    %68 = vmatprep.subr.mxu0 0.0
    %69 = vmatpush1.msra.mxu0 0.0
    %70 = vmatprep.subr.mxu0 0.0
    %71 = vmatpush1.msra.mxu0 0.0
    %72 = vmatprep.subr.mxu0 0.0
    %73 = vmatpush1.msra.mxu0 0.0
    %74 = vmatprep.subr.mxu0 0.0
    %75 = vmatpush1.msra.mxu0 0.0
    %76 = vmatprep.subr.mxu0 0.0
    %77 = vmatpush1.msra.mxu0 0.0
    %78 = vmatprep.subr.mxu0 0.0
    %79 = vmatpush1.msra.mxu0 0.0
    %80 = vmatprep.subr.mxu0 0.0
    %81 = vmatpush1.msra.mxu0 %v51
    %82 = vmatprep.subr.mxu0 0.0
    %83 = vmatpush1.msra.mxu0 %v50
    %84 = vmatprep.subr.mxu0 0.0
    %85 = vmatpush1.msra.mxu0 %v49
    %86 = vmatprep.subr.mxu0 0.0
    %87 = vmatpush1.msra.mxu0 %v48
    %88 = vmatprep.subr.mxu0 0.0
    %89 = vmatpush2.msra.mxu0 0.0
    %90 = vmatprep.subr.mxu0 0.0
    %91 = vmatpush2.msra.mxu0 0.0
    %92 = vmatprep.subr.mxu0 0.0
    %93 = vmatpush2.msra.mxu0 0.0
    %94 = vmatprep.subr.mxu0 0.0
    %95 = vmatpush2.msra.mxu0 0.0
    %96 = vmatprep.subr.mxu0 0.0
    %97 = vmatpush2.msra.mxu0 0.0
    %98 = vmatprep.subr.mxu0 0.0
    %99 = vmatpush2.msra.mxu0 0.0
    %100 = vmatprep.subr.mxu0 0.0
    %101 = vmatpush2.msra.mxu0 0.0
    %102 = vmatprep.subr.mxu0 0.0
    %103 = vmatpush2.msra.mxu0 0.0
    %104 = vmatprep.subr.mxu0 0.0
    %105 = vmatpush2.msra.mxu0 0.0
    %106 = vmatprep.subr.mxu0 0.0
    %107 = vmatpush2.msra.mxu0 0.0
    %108 = vmatprep.subr.mxu0 0.0
    %109 = vmatpush2.msra.mxu0 0.0
    %110 = vmatprep.subr.mxu0 0.0
    %111 = vmatpush2.msra.mxu0 0.0
    %112 = vmatprep.subr.mxu0 0.0
    %113 = vmatpush2.msra.mxu0 0.0
    %114 = vmatprep.subr.mxu0 0.0
    %115 = vmatpush2.msra.mxu0 0.0
    %116 = vmatprep.subr.mxu0 0.0
    %117 = vmatpush2.msra.mxu0 0.0
    %118 = vmatprep.subr.mxu0 0.0
    %119 = vmatpush2.msra.mxu0 0.0
    %120 = vmatprep.mubr.f32.mxu0 0.0
    %121 = vmatmul.mubr.f32.gmra.mxu0 %v54
    %v122 = vpop.f32.mrf.mxu0
    %v123 = vadd.f32 0.0, %v122
    %v124 = vpop.f32.mrf.mxu0
    %125 = vdwg.mxu0
    %v126 = vadd.f32 %v46, %v123
    %127 = vst [vmem:[#allocation2] sm:$0xff] %v126
    // Predicated region
    $region26: #{tpu_custom_call.1} parent=1 // pred_check
      %p128 = pneg %p41
    $region27: #{tpu_custom_call.1} parent=1 // pred_check_branch
      %130 = sbr.rel (%p128) target = $region29
    $region28: #{tpu_custom_call.1} parent=1 // pred_region
      %v131 = vld [vmem:[#allocation2] sm:$0xff]
      %v132 = vld [vmem:[%s2] sm:$0x1]
      %v134 = vlaneseq
      %v135 = vshrl.u32 %v134, 7
      %v136 = vsub.s32 0, %v135
      %v137 = vrot.slane %v132, %v136
      %v139 = vadd.f32 %v131, %v137
      %140 = vst [vmem:[#allocation8] sm:$0xff] %v139
    $region29: #{tpu_custom_call.1} parent=1 // pred_fallthru
      _
    // Predicated region
    $region30: #{tpu_custom_call.1} parent=1 // pred_check
      _
    $region31: #{tpu_custom_call.1} parent=1 // pred_check_branch
      %142 = sbr.rel (0) target = $region33
    $region32: #{tpu_custom_call.1} parent=1 // pred_region
      %s144 = ssub.s32 128, 128
      %145 = vsyncadd [#allocation5], %s144
      %s147 = sshll.u32 [#allocation8], 4
      %s148 = int_to_ptr.vmem [resolvable:$true] %s147
      %150 = dma.vmem_to_hbm [thread:$0]  %s148, 128, %s3, [#allocation5]
    $region33: #{tpu_custom_call.1} parent=1 // pred_fallthru
      _
    // Predicated region
    $region34: #{tpu_custom_call.1} parent=1 // pred_check
      _
    $region35: #{tpu_custom_call.1} parent=1 // pred_check_branch
      %152 = sbr.rel (0) target = $region37
    $region36: #{tpu_custom_call.1} parent=1 // pred_region
      %153 = dma.done [#allocation5], 128
    $region37: #{tpu_custom_call.1} parent=1 // pred_fallthru
      _
    %154 = vsyncpa [#allocation4], 1
    %155 = vsyncpa [#allocation7], 1
    %156 = vsyncpa [#allocation5], 1

// kernel: tpu_custom_call.1
$region0: #{tpu_custom_call.1}
  #allocation0 [shape = 'u32[]', space=smem, size = 0x4, offset = 0x4, fixed_abs, tag = 'smem constant byte address 0x4 - core index']
  #allocation1 [shape = 'u32[144,128]{1,0:T(1,128)}', space=vmem, size = 0x12000, scoped, tag = 'internal scratch']
  #allocation2 [shape = 'f32[8,128]{1,0:T(8,128)}', space=vmem, size = 0x1000, scoped, tag = 'scratch operand']
  %s0 = inlined_call_operand.hbm [shape: f32[8,32], index: 0, kind: input, shape index: {}]
  %s1 = inlined_call_operand.hbm [shape: f32[32,128], index: 1, kind: input, shape index: {}]
  %s2 = inlined_call_operand.vmem [shape: f32[1,128], index: 2, kind: input, shape index: {}]
  %s3 = inlined_call_operand.hbm [shape: f32[8,128], index: 3, kind: output, shape index: {}]
  %s4 = sld [smem:[#allocation0]]
  $region38: #{tpu_custom_call.1} parent=0
    _
  %s6 = ssub.s32 1, %s4
  %s7 = scalar_select 0, %s6, %s4
  $region1: #{tpu_custom_call.1} parent=0
    #allocation3 [shape = 'u8[4096]{0}', space=vmem, size = 0x1000, scoped, tag = 'input window, operand 0, single buffered']
    #allocation4 [shape = 's32[1]{0}', space=sflag, size = 0x4, scoped, tag = 'scoped memory for tpu_custom_call.1']
    #allocation5 [shape = 's32[1]{0}', space=sflag, size = 0x4, scoped, tag = 'scoped memory for tpu_custom_call.1']
    #allocation6 [shape = 'u8[16384]{0}', space=vmem, size = 0x4000, scoped, tag = 'input window, operand 1, single buffered']
    #allocation7 [shape = 's32[1]{0}', space=sflag, size = 0x4, scoped, tag = 'scoped memory for tpu_custom_call.1']
    #allocation8 [shape = 'u8[4096]{0}', space=vmem, size = 0x1000, scoped, tag = 'output window, operand 0, single buffered']
    %8 = vsyncpa [#allocation4], 0
    %9 = vsyncpa [#allocation7], 0
    %10 = vsyncpa [#allocation5], 0
    // Predicated region
    $region2: #{tpu_custom_call.1} parent=1 // pred_check
      _
    $region3: #{tpu_custom_call.1} parent=1 // pred_check_branch
      %12 = sbr.rel (0) target = $region5
    $region4: #{tpu_custom_call.1} parent=1 // pred_region
      %s14 = ssub.s32 128, 128
      %15 = vsyncadd [#allocation4], %s14
      %s17 = sshll.u32 [#allocation3], 4
      %s18 = int_to_ptr.vmem [resolvable:$true] %s17
      %20 = dma.hbm_to_vmem [thread:$0]  %s0, 128, %s18, [#allocation4]
    $region5: #{tpu_custom_call.1} parent=1 // pred_fallthru
      _
    // Predicated region
    $region6: #{tpu_custom_call.1} parent=1 // pred_check
      _
    $region7: #{tpu_custom_call.1} parent=1 // pred_check_branch
      %22 = sbr.rel (0) target = $region9
    $region8: #{tpu_custom_call.1} parent=1 // pred_region
      %s24 = ssub.s32 512, 512
      %25 = vsyncadd [#allocation7], %s24
      %s26 = sshll.u32 [#allocation6], 4
      %s27 = int_to_ptr.vmem [resolvable:$true] %s26
      %32 = dma.hbm_to_vmem [thread:$0]  %s1, 512, %s27, [#allocation7], 128, 128, 8
    $region9: #{tpu_custom_call.1} parent=1 // pred_fallthru
      _
    // Predicated region
    $region10: #{tpu_custom_call.1} parent=1 // pred_check
      _
    $region11: #{tpu_custom_call.1} parent=1 // pred_check_branch
      %34 = sbr.rel (0) target = $region13
    $region12: #{tpu_custom_call.1} parent=1 // pred_region
      _
    $region13: #{tpu_custom_call.1} parent=1 // pred_fallthru
      _
    // Predicated region
    $region14: #{tpu_custom_call.1} parent=1 // pred_check
      _
    $region15: #{tpu_custom_call.1} parent=1 // pred_check_branch
      %36 = sbr.rel (0) target = $region17
    $region16: #{tpu_custom_call.1} parent=1 // pred_region
      %37 = dma.done [#allocation4], 128
    $region17: #{tpu_custom_call.1} parent=1 // pred_fallthru
      _
    // Predicated region
    $region18: #{tpu_custom_call.1} parent=1 // pred_check
      _
    $region19: #{tpu_custom_call.1} parent=1 // pred_check_branch
      %39 = sbr.rel (0) target = $region21
    $region20: #{tpu_custom_call.1} parent=1 // pred_region
      %40 = dma.done [#allocation7], 512
    $region21: #{tpu_custom_call.1} parent=1 // pred_fallthru
      _
    %p41 = scmp.eq.s32.totalorder 0, 0
    // Predicated region
    $region22: #{tpu_custom_call.1} parent=1 // pred_check
      %p42 = pneg %p41
    $region23: #{tpu_custom_call.1} parent=1 // pred_check_branch
      %44 = sbr.rel (%p42) target = $region25
    $region24: #{tpu_custom_call.1} parent=1 // pred_region
      %45 = vst [vmem:[#allocation2] sm:$0xff] 0.0
    $region25: #{tpu_custom_call.1} parent=1 // pred_fallthru
      _
    %v46 = vld [vmem:[#allocation2] sm:$0xff]
    %v47 = vld [vmem:[#allocation3] sm:$0xff]
    %v48 = vld [vmem:[#allocation6] sm:$0xff]
    %v49 = vld [vmem:[#allocation6 + $0x8] sm:$0xff]
    %v50 = vld [vmem:[#allocation6 + $0x10] sm:$0xff]
    %v51 = vld [vmem:[#allocation6 + $0x18] sm:$0xff]
    %vm52 = vcmask 261120
    %v54 = vsel %vm52, %v47, 0
    %56 = vmatprep.subr.mxu0 0.0
    %57 = vmatpush1.msra.mxu0 0.0
    %58 = vmatprep.subr.mxu0 0.0
    %59 = vmatpush1.msra.mxu0 0.0
    %60 = vmatprep.subr.mxu0 0.0
    %61 = vmatpush1.msra.mxu0 0.0
    %62 = vmatprep.subr.mxu0 0.0
    %63 = vmatpush1.msra.mxu0 0.0
    %64 = vmatprep.subr.mxu0 0.0
    %65 = vmatpush1.msra.mxu0 0.0
    %66 = vmatprep.subr.mxu0 0.0
    %67 = vmatpush1.msra.mxu0 0.0
    %68 = vmatprep.subr.mxu0 0.0
    %69 = vmatpush1.msra.mxu0 0.0
    %70 = vmatprep.subr.mxu0 0.0
    %71 = vmatpush1.msra.mxu0 0.0
    %72 = vmatprep.subr.mxu0 0.0
    %73 = vmatpush1.msra.mxu0 0.0
    %74 = vmatprep.subr.mxu0 0.0
    %75 = vmatpush1.msra.mxu0 0.0
    %76 = vmatprep.subr.mxu0 0.0
    %77 = vmatpush1.msra.mxu0 0.0
    %78 = vmatprep.subr.mxu0 0.0
    %79 = vmatpush1.msra.mxu0 0.0
    %80 = vmatprep.subr.mxu0 0.0
    %81 = vmatpush1.msra.mxu0 %v51
    %82 = vmatprep.subr.mxu0 0.0
    %83 = vmatpush1.msra.mxu0 %v50
    %84 = vmatprep.subr.mxu0 0.0
    %85 = vmatpush1.msra.mxu0 %v49
    %86 = vmatprep.subr.mxu0 0.0
    %87 = vmatpush1.msra.mxu0 %v48
    %88 = vmatprep.subr.mxu0 0.0
    %89 = vmatpush2.msra.mxu0 0.0
    %90 = vmatprep.subr.mxu0 0.0
    %91 = vmatpush2.msra.mxu0 0.0
    %92 = vmatprep.subr.mxu0 0.0
    %93 = vmatpush2.msra.mxu0 0.0
    %94 = vmatprep.subr.mxu0 0.0
    %95 = vmatpush2.msra.mxu0 0.0
    %96 = vmatprep.subr.mxu0 0.0
    %97 = vmatpush2.msra.mxu0 0.0
    %98 = vmatprep.subr.mxu0 0.0
    %99 = vmatpush2.msra.mxu0 0.0
    %100 = vmatprep.subr.mxu0 0.0
    %101 = vmatpush2.msra.mxu0 0.0
    %102 = vmatprep.subr.mxu0 0.0
    %103 = vmatpush2.msra.mxu0 0.0
    %104 = vmatprep.subr.mxu0 0.0
    %105 = vmatpush2.msra.mxu0 0.0
    %106 = vmatprep.subr.mxu0 0.0
    %107 = vmatpush2.msra.mxu0 0.0
    %108 = vmatprep.subr.mxu0 0.0
    %109 = vmatpush2.msra.mxu0 0.0
    %110 = vmatprep.subr.mxu0 0.0
    %111 = vmatpush2.msra.mxu0 0.0
    %112 = vmatprep.subr.mxu0 0.0
    %113 = vmatpush2.msra.mxu0 0.0
    %114 = vmatprep.subr.mxu0 0.0
    %115 = vmatpush2.msra.mxu0 0.0
    %116 = vmatprep.subr.mxu0 0.0
    %117 = vmatpush2.msra.mxu0 0.0
    %118 = vmatprep.subr.mxu0 0.0
    %119 = vmatpush2.msra.mxu0 0.0
    %120 = vmatprep.mubr.f32.mxu0 0.0
    %121 = vmatmul.mubr.f32.gmra.mxu0 %v54
    %v122 = vpop.f32.mrf.mxu0
    %v123 = vadd.f32 0.0, %v122
    %v124 = vpop.f32.mrf.mxu0
    %125 = vdwg.mxu0
    %v126 = vadd.f32 %v46, %v123
    %127 = vst [vmem:[#allocation2] sm:$0xff] %v126
    // Predicated region
    $region26: #{tpu_custom_call.1} parent=1 // pred_check
      %p128 = pneg %p41
    $region27: #{tpu_custom_call.1} parent=1 // pred_check_branch
      %130 = sbr.rel (%p128) target = $region29
    $region28: #{tpu_custom_call.1} parent=1 // pred_region
      %v131 = vld [vmem:[#allocation2] sm:$0xff]
      %v132 = vld [vmem:[%s2] sm:$0x1]
      %v134 = vlaneseq
      %v135 = vshrl.u32 %v134, 7
      %v136 = vsub.s32 0, %v135
      %v137 = vrot.slane %v132, %v136
      %v139 = vadd.f32 %v131, %v137
      %140 = vst [vmem:[#allocation8] sm:$0xff] %v139
    $region29: #{tpu_custom_call.1} parent=1 // pred_fallthru
      _
    // Predicated region
    $region30: #{tpu_custom_call.1} parent=1 // pred_check
      _
    $region31: #{tpu_custom_call.1} parent=1 // pred_check_branch
      %142 = sbr.rel (0) target = $region33
    $region32: #{tpu_custom_call.1} parent=1 // pred_region
      %s144 = ssub.s32 128, 128
      %145 = vsyncadd [#allocation5], %s144
      %s147 = sshll.u32 [#allocation8], 4
      %s148 = int_to_ptr.vmem [resolvable:$true] %s147
      %150 = dma.vmem_to_hbm [thread:$0]  %s148, 128, %s3, [#allocation5]
    $region33: #{tpu_custom_call.1} parent=1 // pred_fallthru
      _
    // Predicated region
    $region34: #{tpu_custom_call.1} parent=1 // pred_check
      _
    $region35: #{tpu_custom_call.1} parent=1 // pred_check_branch
      %152 = sbr.rel (0) target = $region37
    $region36: #{tpu_custom_call.1} parent=1 // pred_region
      %153 = dma.done [#allocation5], 128
    $region37: #{tpu_custom_call.1} parent=1 // pred_fallthru
      _
    %154 = vsyncpa [#allocation4], 1
    %155 = vsyncpa [#allocation7], 1
    %156 = vsyncpa [#allocation5], 1

</llo_original>
